<compile_context>
chip_gen: v7x
topology: tpu7x:2x2x1
jax: 0.10.0
libtpu: 0.0.40
codegen_flags: <defaults>
</compile_context>

<pallas_src>
import math

import jax
import jax.numpy as jnp
from jax.experimental import pallas as pl
from jax.experimental.pallas import tpu as pltpu

# ----------------------------- hyper-params (dict p) -----------------------------
D         = 8      # p['data']['d']            (nfeatures)
TIME_EMB  = 32     # p['model']['mlp']['time_emb_size']
NBLOCKS   = 2      # p['model']['mlp']['nblocks']      (mid blocks)
NUNITS    = 64     # p['model']['mlp']['nunits']
BETA      = 1.0    # softplus beta (== 1, so the 1/beta scale is identity)
THRESHOLD = 20.0   # softplus threshold
BATCH     = 16     # whole batch handled in one grid step
LN_EPS    = 1e-5
NTOT      = NBLOCKS + 1   # mid blocks + outblock (same reconstructed structure)

# ------------------------- packed parameter-slab row layout ------------------------
# slab  : (SLAB_ROWS, NUNITS) f32
R_WTM   = 0                 # rows 0:64   w_tm zero-padded to (64, 64)
R_WIN   = R_WTM + NUNITS    # rows 64:72  w_in (D, NUNITS)
R_WTE   = R_WIN + D         # 72          w_te  (1, TIME_EMB) zero-padded to 64 lanes
R_BTE   = R_WTE + 1         # 73          b_te  (padded)
R_BTM   = R_BTE + 1         # 74          b_tm  (padded)
R_BIN   = R_BTM + 1         # 75          b_in
R_GIN   = R_BIN + 1         # 76          LayerNorm gamma (inblock)
R_BEIN  = R_GIN + 1         # 77          LayerNorm beta  (inblock)
R_GBLK  = R_BEIN + 1        # 78:81       per-block LayerNorm gamma
R_BEBLK = R_GBLK + NTOT     # 81:84       per-block LayerNorm beta
SLAB_ROWS = R_BEBLK + NTOT  # 84


# --------------------------------- kernel helpers --------------------------------
def _silu(x):
    # single EUP logistic + one VPU multiply
    return x * jax.nn.sigmoid(x)


def _layernorm_fast(x, gamma, beta):
    # E[x^2] - mu^2 form: the two cross-lane reductions are independent (overlap on XLU)
    mu = jnp.mean(x, axis=-1, keepdims=True)
    ms = jnp.mean(x * x, axis=-1, keepdims=True)
    var = ms - mu * mu
    return (x - mu) * jax.lax.rsqrt(var + LN_EPS) * gamma + beta


def _softplus_fast(y):
    # beta == 1: branch-free softplus, matches the thresholded form within f32 rounding
    return jnp.maximum(y, 0.0) + jnp.log1p(jnp.exp(-jnp.abs(y)))


# ----------------------------------- the kernel -----------------------------------
def mlp_kernel(xt_ref,        # (B, D+1)   [x | timestep]
               w_blk_ref,     # (NTOT, NUNITS, NUNITS)  per-block val weights
               wt_ref,        # (NUNITS+1, NTOT*NUNITS) [Wt_all (K zero-padded to 64) ; fused bias]
               w_last_ref,    # (NUNITS+1, D)           [w_last ; b_last]
               slab_ref,      # (SLAB_ROWS, NUNITS)     packed small params (layout above)
               out_ref):      # (B, D)
    xt = xt_ref[...]
    x = xt[:, :D]                               # (B, D)
    t_in = xt[:, D:D + 1]                       # (B, 1)   timestep.unsqueeze(1)

    # time_mlp: Linear(1, T) -> SiLU -> Linear(T, T) -> SiLU
    # K=1 matmul done as a VPU broadcast multiply; lanes >= TIME_EMB stay exactly 0
    # because w_te/b_te/w_tm/b_tm are zero-padded to 64 lanes.
    t = _silu(t_in * slab_ref[R_WTE:R_WTE + 1, :] + slab_ref[R_BTE:R_BTE + 1, :])
    t = _silu(jnp.dot(t, slab_ref[R_WTM:R_WTM + NUNITS, :],
                      preferred_element_type=jnp.float32)
              + slab_ref[R_BTM:R_BTM + 1, :])                               # (B, 64)

    # Hoisted time projection for all blocks (lane-dense 192-wide, off the critical
    # path: depends only on t).  Fused per-block biases (b_blk + bt_blk) pre-added.
    tproj = jnp.dot(t, wt_ref[:NUNITS, :], preferred_element_type=jnp.float32) \
        + wt_ref[NUNITS:NUNITS + 1, :]                                      # (B, NTOT*64)

    # inblock: Linear(D, NUNITS) -> LayerNorm -> SiLU
    val = jnp.dot(x, slab_ref[R_WIN:R_WIN + D, :], preferred_element_type=jnp.float32) \
        + slab_ref[R_BIN:R_BIN + 1, :]
    val = _silu(_layernorm_fast(val, slab_ref[R_GIN:R_GIN + 1, :],
                                slab_ref[R_BEIN:R_BEIN + 1, :]))            # (B, NUNITS)

    # mid blocks + outblock: one K=64 matmul per block, time contribution pre-computed.
    for i in range(NTOT):
        h = jnp.dot(val, w_blk_ref[i], preferred_element_type=jnp.float32) \
            + tproj[:, i * NUNITS:(i + 1) * NUNITS]
        h = _silu(_layernorm_fast(h, slab_ref[R_GBLK + i:R_GBLK + i + 1, :],
                                  slab_ref[R_BEBLK + i:R_BEBLK + i + 1, :]))
        val = h + val                                                       # skip connection

    # last_layer: Linear(NUNITS, D), then Softplus(beta=1, threshold)
    y = jnp.dot(val, w_last_ref[:NUNITS, :], preferred_element_type=jnp.float32) \
        + w_last_ref[NUNITS:NUNITS + 1, :]
    out_ref[...] = _softplus_fast(y)


# ---------------------------------- JAX wrapper ------------------------------------
def mlp_forward(x, timestep, packed):
    B = x.shape[0]
    xt = jnp.concatenate(
        [x.astype(jnp.float32), timestep.astype(jnp.float32).reshape(-1, 1)], axis=-1)

    grid_spec = pltpu.PrefetchScalarGridSpec(
        num_scalar_prefetch=0,
        grid=(1,),   # single step: whole batch in one tile, no pipeline overhead
        in_specs=[
            pl.BlockSpec((B, D + 1), lambda b: (0, 0)),
            pl.BlockSpec((NTOT, NUNITS, NUNITS), lambda b: (0, 0, 0)),
            pl.BlockSpec((NUNITS + 1, NTOT * NUNITS), lambda b: (0, 0)),
            pl.BlockSpec((NUNITS + 1, D), lambda b: (0, 0)),
            pl.BlockSpec((SLAB_ROWS, NUNITS), lambda b: (0, 0)),
        ],
        out_specs=pl.BlockSpec((B, D), lambda b: (0, 0)),
    )
    return pl.pallas_call(
        mlp_kernel,
        out_shape=jax.ShapeDtypeStruct((B, D), jnp.float32),
        grid_spec=grid_spec,
        compiler_params=pltpu.CompilerParams(dimension_semantics=("arbitrary",)),
    )(xt, packed["w_blk"], packed["wt"], packed["w_last"], packed["slab"])


# ------------------------------ deterministic params -------------------------------
def _init_linear(key, in_dim, out_dim):
    kw, kb = jax.random.split(key)
    bound = 1.0 / math.sqrt(in_dim)
    w = jax.random.uniform(kw, (in_dim, out_dim), jnp.float32, -bound, bound)
    b = jax.random.uniform(kb, (1, out_dim), jnp.float32, -bound, bound)
    return w, b


def init_params(key):
    keys = jax.random.split(key, 5 + 2 * NTOT)
    p = {}
    p["w_te"], p["b_te"] = _init_linear(keys[0], 1, TIME_EMB)            # time_emb (learnable)
    p["w_tm"], p["b_tm"] = _init_linear(keys[1], TIME_EMB, TIME_EMB)     # time_mlp 2nd Linear
    p["w_in"], p["b_in"] = _init_linear(keys[2], D, NUNITS)              # linear_in
    p["g_in"] = jnp.ones((1, NUNITS), jnp.float32)                       # LayerNorm affine
    p["be_in"] = jnp.zeros((1, NUNITS), jnp.float32)

    w_blk, b_blk, wt_blk, bt_blk = [], [], [], []
    for i in range(NTOT):
        w, b = _init_linear(keys[3 + 2 * i], NUNITS, NUNITS)
        wt, bt = _init_linear(keys[4 + 2 * i], TIME_EMB, NUNITS)
        w_blk.append(w); b_blk.append(b); wt_blk.append(wt); bt_blk.append(bt)
    p["w_blk"] = jnp.stack(w_blk)                                        # (NTOT, NUNITS, NUNITS)
    p["b_blk"] = jnp.stack(b_blk)                                        # (NTOT, 1, NUNITS)
    p["wt_blk"] = jnp.stack(wt_blk)                                      # (NTOT, TIME_EMB, NUNITS)
    p["bt_blk"] = jnp.stack(bt_blk)                                      # (NTOT, 1, NUNITS)
    p["g_blk"] = jnp.ones((NTOT, 1, NUNITS), jnp.float32)
    p["be_blk"] = jnp.zeros((NTOT, 1, NUNITS), jnp.float32)

    p["w_last"], p["b_last"] = _init_linear(keys[3 + 2 * NTOT], NUNITS, D)
    return p


def pack_params(p):
    """Fuse / pack the small parameter arrays into 4 kernel weight inputs (offline)."""
    packed = {}
    packed["w_blk"] = p["w_blk"]                                             # (NTOT, 64, 64)

    # Hoisted time-projection weights: (TIME_EMB, NTOT*NUNITS), zero-padded K -> NUNITS,
    # with the fused per-block bias (b_blk + bt_blk) appended as the last row.
    wt_all = jnp.concatenate([p["wt_blk"][i] for i in range(NTOT)], axis=1)  # (32, 192)
    wt_pad = jnp.pad(wt_all, ((0, NUNITS - TIME_EMB), (0, 0)))               # (64, 192)
    bias_all = jnp.concatenate(
        [p["b_blk"][i] + p["bt_blk"][i] for i in range(NTOT)], axis=1)       # (1, 192)
    packed["wt"] = jnp.concatenate([wt_pad, bias_all], axis=0)               # (65, 192)

    packed["w_last"] = jnp.concatenate([p["w_last"], p["b_last"]], axis=0)   # (65, 8)

    pad_lanes = lambda v: jnp.pad(v, ((0, 0), (0, NUNITS - v.shape[1])))
    w_tm_pad = jnp.pad(p["w_tm"],
                       ((0, NUNITS - TIME_EMB), (0, NUNITS - TIME_EMB)))     # (64, 64)
    packed["slab"] = jnp.concatenate(
        [w_tm_pad,                                   # rows 0:64
         p["w_in"],                                  # rows 64:72
         pad_lanes(p["w_te"]),                       # 72
         pad_lanes(p["b_te"]),                       # 73
         pad_lanes(p["b_tm"]),                       # 74
         p["b_in"], p["g_in"], p["be_in"],           # 75, 76, 77
         p["g_blk"].reshape(NTOT, NUNITS),           # 78:81
         p["be_blk"].reshape(NTOT, NUNITS)], axis=0) # 81:84
    assert packed["slab"].shape == (SLAB_ROWS, NUNITS)
    return packed


# --------------------------- pure-JAX reference (sanity) ----------------------------
def _layernorm_ref(x, gamma, beta):
    mu = jnp.mean(x, axis=-1, keepdims=True)
    var = jnp.mean((x - mu) ** 2, axis=-1, keepdims=True)
    return (x - mu) * jax.lax.rsqrt(var + LN_EPS) * gamma + beta


def _softplus_ref(y):
    # PyTorch-style thresholded softplus (beta == 1)
    return jnp.where(y > THRESHOLD, y, jnp.log1p(jnp.exp(jnp.minimum(y, THRESHOLD))))


def mlp_forward_ref(x, timestep, p):
    x = x.astype(jnp.float32)
    t = timestep.astype(jnp.float32).reshape(-1, 1)
    t = _silu(t @ p["w_te"] + p["b_te"])
    t = _silu(t @ p["w_tm"] + p["b_tm"])
    val = _silu(_layernorm_ref(x @ p["w_in"] + p["b_in"], p["g_in"], p["be_in"]))
    for i in range(NTOT):
        h = val @ p["w_blk"][i] + p["b_blk"][i] + t @ p["wt_blk"][i] + p["bt_blk"][i]
        val = _silu(_layernorm_ref(h, p["g_blk"][i], p["be_blk"][i])) + val
    return _softplus_ref(val @ p["w_last"] + p["b_last"])


# --------------------------------------- main ---------------------------------------
if __name__ == "__main__":
    key = jax.random.PRNGKey(0)
    kx, kt, kp = jax.random.split(key, 3)

    x = jax.random.normal(kx, (BATCH, D), jnp.float32)
    timestep = jax.random.randint(kt, (BATCH,), 0, 1000).astype(jnp.float32)
    params = init_params(kp)
    packed = pack_params(params)

    out = mlp_forward(x, timestep, packed)
    out = jax.block_until_ready(out)

    ref = mlp_forward_ref(x, timestep, params)
    assert out.shape == (BATCH, D)
    assert jnp.allclose(out, ref, rtol=1e-3, atol=2e-4), "mismatch vs pure-JAX reference"

    print("KERNEL_OK")
</pallas_src>

<mosaic_0001>
module attributes {stable_mosaic.version = 11 : i64} {
  func.func @mlp_kernel(%arg0: i32, %arg1: memref<16x9xf32, #tpu.memory_space<vmem>>, %arg2: memref<3x64x64xf32, #tpu.memory_space<vmem>>, %arg3: memref<65x192xf32, #tpu.memory_space<vmem>>, %arg4: memref<65x8xf32, #tpu.memory_space<vmem>>, %arg5: memref<84x64xf32, #tpu.memory_space<vmem>>, %arg6: memref<16x8xf32, #tpu.memory_space<vmem>>) attributes {dimension_semantics = [#tpu.dimension_semantics<arbitrary>], iteration_bounds = array<i64: 1>, scalar_prefetch = 0 : i64, scratch_operands = 0 : i64, tpu.core_type = #tpu.core_type<tc>, window_params = [{pipeline_mode = #tpu.pipeline_mode<synchronous>, transform_indices = @transform_0, window_bounds = array<i64: 16, 9>}, {pipeline_mode = #tpu.pipeline_mode<synchronous>, transform_indices = @transform_1, window_bounds = array<i64: 3, 64, 64>}, {pipeline_mode = #tpu.pipeline_mode<synchronous>, transform_indices = @transform_2, window_bounds = array<i64: 65, 192>}, {pipeline_mode = #tpu.pipeline_mode<synchronous>, transform_indices = @transform_3, window_bounds = array<i64: 65, 8>}, {pipeline_mode = #tpu.pipeline_mode<synchronous>, transform_indices = @transform_4, window_bounds = array<i64: 84, 64>}, {pipeline_mode = #tpu.pipeline_mode<synchronous>, transform_indices = @transform_5, window_bounds = array<i64: 16, 8>}]} {
    %c0 = arith.constant 0 : index
    %c0_0 = arith.constant 0 : index
    %0 = vector.load %arg1[%c0, %c0_0] : memref<16x9xf32, #tpu.memory_space<vmem>>, vector<16x9xf32>
    %1 = vector.extract_strided_slice %0 {offsets = [0, 0], sizes = [16, 8], strides = [1, 1]} : vector<16x9xf32> to vector<16x8xf32>
    %2 = vector.extract_strided_slice %0 {offsets = [0, 8], sizes = [16, 1], strides = [1, 1]} : vector<16x9xf32> to vector<16x1xf32>
    %c72 = arith.constant 72 : index
    %c0_1 = arith.constant 0 : index
    %3 = vector.load %arg5[%c72, %c0_1] : memref<84x64xf32, #tpu.memory_space<vmem>>, vector<1x64xf32>
    %4 = vector.broadcast %2 : vector<16x1xf32> to vector<16x64xf32>
    %5 = vector.broadcast %3 : vector<1x64xf32> to vector<16x64xf32>
    %6 = arith.mulf %4, %5 : vector<16x64xf32>
    %c73 = arith.constant 73 : index
    %c0_2 = arith.constant 0 : index
    %7 = vector.load %arg5[%c73, %c0_2] : memref<84x64xf32, #tpu.memory_space<vmem>>, vector<1x64xf32>
    %8 = vector.broadcast %7 : vector<1x64xf32> to vector<16x64xf32>
    %9 = arith.addf %6, %8 : vector<16x64xf32>
    %10 = arith.negf %9 : vector<16x64xf32>
    %11 = math.exp %10 : vector<16x64xf32>
    %cst = arith.constant 1.000000e+00 : f32
    %12 = vector.broadcast %cst : f32 to vector<16x64xf32>
    %13 = arith.addf %12, %11 : vector<16x64xf32>
    %14 = arith.divf %12, %13 : vector<16x64xf32>
    %15 = arith.mulf %9, %14 : vector<16x64xf32>
    %c0_3 = arith.constant 0 : index
    %c0_4 = arith.constant 0 : index
    %16 = vector.load %arg5[%c0_3, %c0_4] : memref<84x64xf32, #tpu.memory_space<vmem>>, vector<64x64xf32>
    %cst_5 = arith.constant dense<0.000000e+00> : vector<16x64xf32>
    %17 = tpu.matmul %15, %16, %cst_5 {dimension_numbers = #tpu.dot_dimension_numbers<[1], [0], [0], [1], [0, 0, 1, 1], [], []>} : vector<16x64xf32>, vector<64x64xf32>, vector<16x64xf32> -> vector<16x64xf32>
    %c74 = arith.constant 74 : index
    %c0_6 = arith.constant 0 : index
    %18 = vector.load %arg5[%c74, %c0_6] : memref<84x64xf32, #tpu.memory_space<vmem>>, vector<1x64xf32>
    %19 = vector.broadcast %18 : vector<1x64xf32> to vector<16x64xf32>
    %20 = arith.addf %17, %19 : vector<16x64xf32>
    %21 = arith.negf %20 : vector<16x64xf32>
    %22 = math.exp %21 : vector<16x64xf32>
    %cst_7 = arith.constant 1.000000e+00 : f32
    %23 = vector.broadcast %cst_7 : f32 to vector<16x64xf32>
    %24 = arith.addf %23, %22 : vector<16x64xf32>
    %25 = arith.divf %23, %24 : vector<16x64xf32>
    %26 = arith.mulf %20, %25 : vector<16x64xf32>
    %c0_8 = arith.constant 0 : index
    %c0_9 = arith.constant 0 : index
    %27 = vector.load %arg3[%c0_8, %c0_9] : memref<65x192xf32, #tpu.memory_space<vmem>>, vector<64x192xf32>
    %cst_10 = arith.constant dense<0.000000e+00> : vector<16x192xf32>
    %28 = tpu.matmul %26, %27, %cst_10 {dimension_numbers = #tpu.dot_dimension_numbers<[1], [0], [0], [1], [0, 0, 1, 1], [], []>} : vector<16x64xf32>, vector<64x192xf32>, vector<16x192xf32> -> vector<16x192xf32>
    %c64 = arith.constant 64 : index
    %c0_11 = arith.constant 0 : index
    %29 = vector.load %arg3[%c64, %c0_11] : memref<65x192xf32, #tpu.memory_space<vmem>>, vector<1x192xf32>
    %30 = vector.broadcast %29 : vector<1x192xf32> to vector<16x192xf32>
    %31 = arith.addf %28, %30 : vector<16x192xf32>
    %c64_12 = arith.constant 64 : index
    %c0_13 = arith.constant 0 : index
    %32 = vector.load %arg5[%c64_12, %c0_13] : memref<84x64xf32, #tpu.memory_space<vmem>>, vector<8x64xf32>
    %cst_14 = arith.constant dense<0.000000e+00> : vector<16x64xf32>
    %33 = tpu.matmul %1, %32, %cst_14 {dimension_numbers = #tpu.dot_dimension_numbers<[1], [0], [0], [1], [0, 0, 1, 1], [], []>} : vector<16x8xf32>, vector<8x64xf32>, vector<16x64xf32> -> vector<16x64xf32>
    %c75 = arith.constant 75 : index
    %c0_15 = arith.constant 0 : index
    %34 = vector.load %arg5[%c75, %c0_15] : memref<84x64xf32, #tpu.memory_space<vmem>>, vector<1x64xf32>
    %35 = vector.broadcast %34 : vector<1x64xf32> to vector<16x64xf32>
    %36 = arith.addf %33, %35 : vector<16x64xf32>
    %c76 = arith.constant 76 : index
    %c0_16 = arith.constant 0 : index
    %37 = vector.load %arg5[%c76, %c0_16] : memref<84x64xf32, #tpu.memory_space<vmem>>, vector<1x64xf32>
    %c77 = arith.constant 77 : index
    %c0_17 = arith.constant 0 : index
    %38 = vector.load %arg5[%c77, %c0_17] : memref<84x64xf32, #tpu.memory_space<vmem>>, vector<1x64xf32>
    %cst_18 = arith.constant dense<0.000000e+00> : vector<16xf32>
    %39 = vector.multi_reduction <add>, %36, %cst_18 [1] : vector<16x64xf32> to vector<16xf32>
    %40 = vector.shape_cast %39 : vector<16xf32> to vector<16x1xf32>
    %cst_19 = arith.constant 6.400000e+01 : f32
    %41 = vector.broadcast %cst_19 : f32 to vector<16x1xf32>
    %42 = arith.divf %40, %41 : vector<16x1xf32>
    %43 = arith.mulf %36, %36 : vector<16x64xf32>
    %cst_20 = arith.constant dense<0.000000e+00> : vector<16xf32>
    %44 = vector.multi_reduction <add>, %43, %cst_20 [1] : vector<16x64xf32> to vector<16xf32>
    %45 = vector.shape_cast %44 : vector<16xf32> to vector<16x1xf32>
    %cst_21 = arith.constant 6.400000e+01 : f32
    %46 = vector.broadcast %cst_21 : f32 to vector<16x1xf32>
    %47 = arith.divf %45, %46 : vector<16x1xf32>
    %48 = arith.mulf %42, %42 : vector<16x1xf32>
    %49 = arith.subf %47, %48 : vector<16x1xf32>
    %50 = vector.broadcast %42 : vector<16x1xf32> to vector<16x64xf32>
    %51 = arith.subf %36, %50 : vector<16x64xf32>
    %cst_22 = arith.constant 9.99999974E-6 : f32
    %52 = vector.broadcast %cst_22 : f32 to vector<16x1xf32>
    %53 = arith.addf %49, %52 : vector<16x1xf32>
    %54 = math.rsqrt %53 : vector<16x1xf32>
    %55 = vector.broadcast %54 : vector<16x1xf32> to vector<16x64xf32>
    %56 = arith.mulf %51, %55 : vector<16x64xf32>
    %57 = vector.broadcast %37 : vector<1x64xf32> to vector<16x64xf32>
    %58 = arith.mulf %56, %57 : vector<16x64xf32>
    %59 = vector.broadcast %38 : vector<1x64xf32> to vector<16x64xf32>
    %60 = arith.addf %58, %59 : vector<16x64xf32>
    %61 = arith.negf %60 : vector<16x64xf32>
    %62 = math.exp %61 : vector<16x64xf32>
    %cst_23 = arith.constant 1.000000e+00 : f32
    %63 = vector.broadcast %cst_23 : f32 to vector<16x64xf32>
    %64 = arith.addf %63, %62 : vector<16x64xf32>
    %65 = arith.divf %63, %64 : vector<16x64xf32>
    %66 = arith.mulf %60, %65 : vector<16x64xf32>
    %c0_24 = arith.constant 0 : index
    %c0_25 = arith.constant 0 : index
    %c0_26 = arith.constant 0 : index
    %67 = vector.load %arg2[%c0_24, %c0_25, %c0_26] : memref<3x64x64xf32, #tpu.memory_space<vmem>>, vector<1x64x64xf32>
    %68 = vector.shape_cast %67 : vector<1x64x64xf32> to vector<64x64xf32>
    %cst_27 = arith.constant dense<0.000000e+00> : vector<16x64xf32>
    %69 = tpu.matmul %66, %68, %cst_27 {dimension_numbers = #tpu.dot_dimension_numbers<[1], [0], [0], [1], [0, 0, 1, 1], [], []>} : vector<16x64xf32>, vector<64x64xf32>, vector<16x64xf32> -> vector<16x64xf32>
    %70 = vector.extract_strided_slice %31 {offsets = [0, 0], sizes = [16, 64], strides = [1, 1]} : vector<16x192xf32> to vector<16x64xf32>
    %71 = arith.addf %69, %70 : vector<16x64xf32>
    %c78 = arith.constant 78 : index
    %c0_28 = arith.constant 0 : index
    %72 = vector.load %arg5[%c78, %c0_28] : memref<84x64xf32, #tpu.memory_space<vmem>>, vector<1x64xf32>
    %c81 = arith.constant 81 : index
    %c0_29 = arith.constant 0 : index
    %73 = vector.load %arg5[%c81, %c0_29] : memref<84x64xf32, #tpu.memory_space<vmem>>, vector<1x64xf32>
    %cst_30 = arith.constant dense<0.000000e+00> : vector<16xf32>
    %74 = vector.multi_reduction <add>, %71, %cst_30 [1] : vector<16x64xf32> to vector<16xf32>
    %75 = vector.shape_cast %74 : vector<16xf32> to vector<16x1xf32>
    %cst_31 = arith.constant 6.400000e+01 : f32
    %76 = vector.broadcast %cst_31 : f32 to vector<16x1xf32>
    %77 = arith.divf %75, %76 : vector<16x1xf32>
    %78 = arith.mulf %71, %71 : vector<16x64xf32>
    %cst_32 = arith.constant dense<0.000000e+00> : vector<16xf32>
    %79 = vector.multi_reduction <add>, %78, %cst_32 [1] : vector<16x64xf32> to vector<16xf32>
    %80 = vector.shape_cast %79 : vector<16xf32> to vector<16x1xf32>
    %cst_33 = arith.constant 6.400000e+01 : f32
    %81 = vector.broadcast %cst_33 : f32 to vector<16x1xf32>
    %82 = arith.divf %80, %81 : vector<16x1xf32>
    %83 = arith.mulf %77, %77 : vector<16x1xf32>
    %84 = arith.subf %82, %83 : vector<16x1xf32>
    %85 = vector.broadcast %77 : vector<16x1xf32> to vector<16x64xf32>
    %86 = arith.subf %71, %85 : vector<16x64xf32>
    %cst_34 = arith.constant 9.99999974E-6 : f32
    %87 = vector.broadcast %cst_34 : f32 to vector<16x1xf32>
    %88 = arith.addf %84, %87 : vector<16x1xf32>
    %89 = math.rsqrt %88 : vector<16x1xf32>
    %90 = vector.broadcast %89 : vector<16x1xf32> to vector<16x64xf32>
    %91 = arith.mulf %86, %90 : vector<16x64xf32>
    %92 = vector.broadcast %72 : vector<1x64xf32> to vector<16x64xf32>
    %93 = arith.mulf %91, %92 : vector<16x64xf32>
    %94 = vector.broadcast %73 : vector<1x64xf32> to vector<16x64xf32>
    %95 = arith.addf %93, %94 : vector<16x64xf32>
    %96 = arith.negf %95 : vector<16x64xf32>
    %97 = math.exp %96 : vector<16x64xf32>
    %cst_35 = arith.constant 1.000000e+00 : f32
    %98 = vector.broadcast %cst_35 : f32 to vector<16x64xf32>
    %99 = arith.addf %98, %97 : vector<16x64xf32>
    %100 = arith.divf %98, %99 : vector<16x64xf32>
    %101 = arith.mulf %95, %100 : vector<16x64xf32>
    %102 = arith.addf %101, %66 : vector<16x64xf32>
    %c1 = arith.constant 1 : index
    %c0_36 = arith.constant 0 : index
    %c0_37 = arith.constant 0 : index
    %103 = vector.load %arg2[%c1, %c0_36, %c0_37] : memref<3x64x64xf32, #tpu.memory_space<vmem>>, vector<1x64x64xf32>
    %104 = vector.shape_cast %103 : vector<1x64x64xf32> to vector<64x64xf32>
    %cst_38 = arith.constant dense<0.000000e+00> : vector<16x64xf32>
    %105 = tpu.matmul %102, %104, %cst_38 {dimension_numbers = #tpu.dot_dimension_numbers<[1], [0], [0], [1], [0, 0, 1, 1], [], []>} : vector<16x64xf32>, vector<64x64xf32>, vector<16x64xf32> -> vector<16x64xf32>
    %106 = vector.extract_strided_slice %31 {offsets = [0, 64], sizes = [16, 64], strides = [1, 1]} : vector<16x192xf32> to vector<16x64xf32>
    %107 = arith.addf %105, %106 : vector<16x64xf32>
    %c79 = arith.constant 79 : index
    %c0_39 = arith.constant 0 : index
    %108 = vector.load %arg5[%c79, %c0_39] : memref<84x64xf32, #tpu.memory_space<vmem>>, vector<1x64xf32>
    %c82 = arith.constant 82 : index
    %c0_40 = arith.constant 0 : index
    %109 = vector.load %arg5[%c82, %c0_40] : memref<84x64xf32, #tpu.memory_space<vmem>>, vector<1x64xf32>
    %cst_41 = arith.constant dense<0.000000e+00> : vector<16xf32>
    %110 = vector.multi_reduction <add>, %107, %cst_41 [1] : vector<16x64xf32> to vector<16xf32>
    %111 = vector.shape_cast %110 : vector<16xf32> to vector<16x1xf32>
    %cst_42 = arith.constant 6.400000e+01 : f32
    %112 = vector.broadcast %cst_42 : f32 to vector<16x1xf32>
    %113 = arith.divf %111, %112 : vector<16x1xf32>
    %114 = arith.mulf %107, %107 : vector<16x64xf32>
    %cst_43 = arith.constant dense<0.000000e+00> : vector<16xf32>
    %115 = vector.multi_reduction <add>, %114, %cst_43 [1] : vector<16x64xf32> to vector<16xf32>
    %116 = vector.shape_cast %115 : vector<16xf32> to vector<16x1xf32>
    %cst_44 = arith.constant 6.400000e+01 : f32
    %117 = vector.broadcast %cst_44 : f32 to vector<16x1xf32>
    %118 = arith.divf %116, %117 : vector<16x1xf32>
    %119 = arith.mulf %113, %113 : vector<16x1xf32>
    %120 = arith.subf %118, %119 : vector<16x1xf32>
    %121 = vector.broadcast %113 : vector<16x1xf32> to vector<16x64xf32>
    %122 = arith.subf %107, %121 : vector<16x64xf32>
    %cst_45 = arith.constant 9.99999974E-6 : f32
    %123 = vector.broadcast %cst_45 : f32 to vector<16x1xf32>
    %124 = arith.addf %120, %123 : vector<16x1xf32>
    %125 = math.rsqrt %124 : vector<16x1xf32>
    %126 = vector.broadcast %125 : vector<16x1xf32> to vector<16x64xf32>
    %127 = arith.mulf %122, %126 : vector<16x64xf32>
    %128 = vector.broadcast %108 : vector<1x64xf32> to vector<16x64xf32>
    %129 = arith.mulf %127, %128 : vector<16x64xf32>
    %130 = vector.broadcast %109 : vector<1x64xf32> to vector<16x64xf32>
    %131 = arith.addf %129, %130 : vector<16x64xf32>
    %132 = arith.negf %131 : vector<16x64xf32>
    %133 = math.exp %132 : vector<16x64xf32>
    %cst_46 = arith.constant 1.000000e+00 : f32
    %134 = vector.broadcast %cst_46 : f32 to vector<16x64xf32>
    %135 = arith.addf %134, %133 : vector<16x64xf32>
    %136 = arith.divf %134, %135 : vector<16x64xf32>
    %137 = arith.mulf %131, %136 : vector<16x64xf32>
    %138 = arith.addf %137, %102 : vector<16x64xf32>
    %c2 = arith.constant 2 : index
    %c0_47 = arith.constant 0 : index
    %c0_48 = arith.constant 0 : index
    %139 = vector.load %arg2[%c2, %c0_47, %c0_48] : memref<3x64x64xf32, #tpu.memory_space<vmem>>, vector<1x64x64xf32>
    %140 = vector.shape_cast %139 : vector<1x64x64xf32> to vector<64x64xf32>
    %cst_49 = arith.constant dense<0.000000e+00> : vector<16x64xf32>
    %141 = tpu.matmul %138, %140, %cst_49 {dimension_numbers = #tpu.dot_dimension_numbers<[1], [0], [0], [1], [0, 0, 1, 1], [], []>} : vector<16x64xf32>, vector<64x64xf32>, vector<16x64xf32> -> vector<16x64xf32>
    %142 = vector.extract_strided_slice %31 {offsets = [0, 128], sizes = [16, 64], strides = [1, 1]} : vector<16x192xf32> to vector<16x64xf32>
    %143 = arith.addf %141, %142 : vector<16x64xf32>
    %c80 = arith.constant 80 : index
    %c0_50 = arith.constant 0 : index
    %144 = vector.load %arg5[%c80, %c0_50] : memref<84x64xf32, #tpu.memory_space<vmem>>, vector<1x64xf32>
    %c83 = arith.constant 83 : index
    %c0_51 = arith.constant 0 : index
    %145 = vector.load %arg5[%c83, %c0_51] : memref<84x64xf32, #tpu.memory_space<vmem>>, vector<1x64xf32>
    %cst_52 = arith.constant dense<0.000000e+00> : vector<16xf32>
    %146 = vector.multi_reduction <add>, %143, %cst_52 [1] : vector<16x64xf32> to vector<16xf32>
    %147 = vector.shape_cast %146 : vector<16xf32> to vector<16x1xf32>
    %cst_53 = arith.constant 6.400000e+01 : f32
    %148 = vector.broadcast %cst_53 : f32 to vector<16x1xf32>
    %149 = arith.divf %147, %148 : vector<16x1xf32>
    %150 = arith.mulf %143, %143 : vector<16x64xf32>
    %cst_54 = arith.constant dense<0.000000e+00> : vector<16xf32>
    %151 = vector.multi_reduction <add>, %150, %cst_54 [1] : vector<16x64xf32> to vector<16xf32>
    %152 = vector.shape_cast %151 : vector<16xf32> to vector<16x1xf32>
    %cst_55 = arith.constant 6.400000e+01 : f32
    %153 = vector.broadcast %cst_55 : f32 to vector<16x1xf32>
    %154 = arith.divf %152, %153 : vector<16x1xf32>
    %155 = arith.mulf %149, %149 : vector<16x1xf32>
    %156 = arith.subf %154, %155 : vector<16x1xf32>
    %157 = vector.broadcast %149 : vector<16x1xf32> to vector<16x64xf32>
    %158 = arith.subf %143, %157 : vector<16x64xf32>
    %cst_56 = arith.constant 9.99999974E-6 : f32
    %159 = vector.broadcast %cst_56 : f32 to vector<16x1xf32>
    %160 = arith.addf %156, %159 : vector<16x1xf32>
    %161 = math.rsqrt %160 : vector<16x1xf32>
    %162 = vector.broadcast %161 : vector<16x1xf32> to vector<16x64xf32>
    %163 = arith.mulf %158, %162 : vector<16x64xf32>
    %164 = vector.broadcast %144 : vector<1x64xf32> to vector<16x64xf32>
    %165 = arith.mulf %163, %164 : vector<16x64xf32>
    %166 = vector.broadcast %145 : vector<1x64xf32> to vector<16x64xf32>
    %167 = arith.addf %165, %166 : vector<16x64xf32>
    %168 = arith.negf %167 : vector<16x64xf32>
    %169 = math.exp %168 : vector<16x64xf32>
    %cst_57 = arith.constant 1.000000e+00 : f32
    %170 = vector.broadcast %cst_57 : f32 to vector<16x64xf32>
    %171 = arith.addf %170, %169 : vector<16x64xf32>
    %172 = arith.divf %170, %171 : vector<16x64xf32>
    %173 = arith.mulf %167, %172 : vector<16x64xf32>
    %174 = arith.addf %173, %138 : vector<16x64xf32>
    %c0_58 = arith.constant 0 : index
    %c0_59 = arith.constant 0 : index
    %175 = vector.load %arg4[%c0_58, %c0_59] : memref<65x8xf32, #tpu.memory_space<vmem>>, vector<64x8xf32>
    %cst_60 = arith.constant dense<0.000000e+00> : vector<16x8xf32>
    %176 = tpu.matmul %174, %175, %cst_60 {dimension_numbers = #tpu.dot_dimension_numbers<[1], [0], [0], [1], [0, 0, 1, 1], [], []>} : vector<16x64xf32>, vector<64x8xf32>, vector<16x8xf32> -> vector<16x8xf32>
    %c64_61 = arith.constant 64 : index
    %c0_62 = arith.constant 0 : index
    %177 = vector.load %arg4[%c64_61, %c0_62] : memref<65x8xf32, #tpu.memory_space<vmem>>, vector<1x8xf32>
    %178 = vector.broadcast %177 : vector<1x8xf32> to vector<16x8xf32>
    %179 = arith.addf %176, %178 : vector<16x8xf32>
    %cst_63 = arith.constant 0.000000e+00 : f32
    %180 = vector.broadcast %cst_63 : f32 to vector<16x8xf32>
    %181 = arith.maximumf %179, %180 : vector<16x8xf32>
    %182 = math.absf %179 : vector<16x8xf32>
    %cst_64 = arith.constant 0.000000e+00 : f32
    %183 = vector.broadcast %cst_64 : f32 to vector<16x8xf32>
    %184 = arith.subf %183, %182 : vector<16x8xf32>
    %185 = math.exp %184 : vector<16x8xf32>
    %186 = math.log1p %185 : vector<16x8xf32>
    %187 = arith.addf %181, %186 : vector<16x8xf32>
    %c0_65 = arith.constant 0 : index
    %c0_66 = arith.constant 0 : index
    %188 = vector.load %arg6[%c0_65, %c0_66] : memref<16x8xf32, #tpu.memory_space<vmem>>, vector<16x8xf32>
    tpu.vector_store %arg6[%c0_65, %c0_66], %187 {strides = array<i32>} : memref<16x8xf32, #tpu.memory_space<vmem>>, vector<16x8xf32>,
    return
  }
  func.func @transform_0(%arg0: i32) -> (i32, i32) {
    %c0_i32 = arith.constant 0 : i32
    %c0_i32_0 = arith.constant 0 : i32
    %c0_i32_1 = arith.constant 0 : i32
    return %c0_i32, %c0_i32_0 : i32, i32
  }
  func.func @transform_1(%arg0: i32) -> (i32, i32, i32) {
    %c0_i32 = arith.constant 0 : i32
    %c0_i32_0 = arith.constant 0 : i32
    %c0_i32_1 = arith.constant 0 : i32
    %c0_i32_2 = arith.constant 0 : i32
    return %c0_i32, %c0_i32_0, %c0_i32_1 : i32, i32, i32
  }
  func.func @transform_2(%arg0: i32) -> (i32, i32) {
    %c0_i32 = arith.constant 0 : i32
    %c0_i32_0 = arith.constant 0 : i32
    %c0_i32_1 = arith.constant 0 : i32
    return %c0_i32, %c0_i32_0 : i32, i32
  }
  func.func @transform_3(%arg0: i32) -> (i32, i32) {
    %c0_i32 = arith.constant 0 : i32
    %c0_i32_0 = arith.constant 0 : i32
    %c0_i32_1 = arith.constant 0 : i32
    return %c0_i32, %c0_i32_0 : i32, i32
  }
  func.func @transform_4(%arg0: i32) -> (i32, i32) {
    %c0_i32 = arith.constant 0 : i32
    %c0_i32_0 = arith.constant 0 : i32
    %c0_i32_1 = arith.constant 0 : i32
    return %c0_i32, %c0_i32_0 : i32, i32
  }
  func.func @transform_5(%arg0: i32) -> (i32, i32) {
    %c0_i32 = arith.constant 0 : i32
    %c0_i32_0 = arith.constant 0 : i32
    %c0_i32_1 = arith.constant 0 : i32
    return %c0_i32, %c0_i32_0 : i32, i32
  }
}

</mosaic_0001>

<llo_original>
// kernel: tpu_custom_call.1
$region0: #{tpu_custom_call.1}
  #allocation0 [shape = 'u32[]', space=smem, size = 0x4, offset = 0x4, fixed_abs, tag = 'smem constant byte address 0x4 - core index']
  #allocation1 [shape = 'u32[144,128]{1,0:T(1,128)}', space=vmem, size = 0x12000, scoped, tag = 'internal scratch']
  %s0 = inlined_call_operand.vmem [shape: f32[16,9], index: 0, kind: input, shape index: {}]
  %s1 = inlined_call_operand.vmem [shape: f32[3,64,64], index: 1, kind: input, shape index: {}]
  %s2 = inlined_call_operand.hbm [shape: f32[65,192], index: 2, kind: input, shape index: {}]
  %s3 = inlined_call_operand.vmem [shape: f32[65,8], index: 3, kind: input, shape index: {}]
  %s4 = inlined_call_operand.vmem [shape: f32[84,64], index: 4, kind: input, shape index: {}]
  %s5 = inlined_call_operand.vmem [shape: f32[16,8], index: 5, kind: output, shape index: {}]
  %s6 = sld [smem:[#allocation0]]
  $region34: #{tpu_custom_call.1} parent=0
    _
  %s8 = ssub.s32 1, %s6
  %s9 = scalar_select 0, %s8, %s6
  $region1: #{tpu_custom_call.1} parent=0
    #allocation2 [shape = 'u8[73728]{0}', space=vmem, size = 0x12000, scoped, tag = 'input window, operand 2, single buffered']
    #allocation3 [shape = 's32[1]{0}', space=sflag, size = 0x4, scoped, tag = 'scoped memory for tpu_custom_call.1']
    %10 = vsyncpa [#allocation3], 0
    // Predicated region
    $region2: #{tpu_custom_call.1} parent=1 // pred_check
      _
    $region3: #{tpu_custom_call.1} parent=1 // pred_check_branch
      %12 = sbr.rel (0) target = $region5
    $region4: #{tpu_custom_call.1} parent=1 // pred_region
      _
    $region5: #{tpu_custom_call.1} parent=1 // pred_fallthru
      _
    // Predicated region
    $region6: #{tpu_custom_call.1} parent=1 // pred_check
      _
    $region7: #{tpu_custom_call.1} parent=1 // pred_check_branch
      %14 = sbr.rel (0) target = $region9
    $region8: #{tpu_custom_call.1} parent=1 // pred_region
      _
    $region9: #{tpu_custom_call.1} parent=1 // pred_fallthru
      _
    // Predicated region
    $region10: #{tpu_custom_call.1} parent=1 // pred_check
      _
    $region11: #{tpu_custom_call.1} parent=1 // pred_check_branch
      %16 = sbr.rel (0) target = $region13
    $region12: #{tpu_custom_call.1} parent=1 // pred_region
      %s18 = ssub.s32 2304, 2304
      %19 = vsyncadd [#allocation3], %s18
      %s20 = sshll.u32 [#allocation2], 4
      %s21 = int_to_ptr.vmem [resolvable:$true] %s20
      %26 = dma.hbm_to_vmem [thread:$0]  %s2, 2304, %s21, [#allocation3], 256, 256, 16
    $region13: #{tpu_custom_call.1} parent=1 // pred_fallthru
      _
    // Predicated region
    $region14: #{tpu_custom_call.1} parent=1 // pred_check
      _
    $region15: #{tpu_custom_call.1} parent=1 // pred_check_branch
      %28 = sbr.rel (0) target = $region17
    $region16: #{tpu_custom_call.1} parent=1 // pred_region
      _
    $region17: #{tpu_custom_call.1} parent=1 // pred_fallthru
      _
    // Predicated region
    $region18: #{tpu_custom_call.1} parent=1 // pred_check
      _
    $region19: #{tpu_custom_call.1} parent=1 // pred_check_branch
      %30 = sbr.rel (0) target = $region21
    $region20: #{tpu_custom_call.1} parent=1 // pred_region
      _
    $region21: #{tpu_custom_call.1} parent=1 // pred_fallthru
      _
    // Predicated region
    $region22: #{tpu_custom_call.1} parent=1 // pred_check
      _
    $region23: #{tpu_custom_call.1} parent=1 // pred_check_branch
      %32 = sbr.rel (0) target = $region25
    $region24: #{tpu_custom_call.1} parent=1 // pred_region
      %33 = dma.done [#allocation3], 2304
    $region25: #{tpu_custom_call.1} parent=1 // pred_fallthru
      _
    %v34 = vld [vmem:[%s0] sm:$0xff]
    %v35 = vld [vmem:[%s0 + $0x8] sm:$0xff]
    %v36 = vld [vmem:[%s4 + $0x48] sm:$0x1]
    %38 = vset.pattern.permute.xlu0 8
    %39 = vperm.xlu0 %38, %v34
    %v40 = vpop.permute.xlu0 %39
    %43 = vset.pattern.permute.xlu0 8
    %44 = vperm.xlu0 %43, %v35
    %v45 = vpop.permute.xlu0 %44
    %v47 = vlaneseq
    %v48 = vshrl.u32 %v47, 7
    %v49 = vsub.s32 0, %v48
    %v50 = vrot.slane %v36, %v49
    %v51 = vmul.f32 %v40, %v50
    %v52 = vmul.f32 %v45, %v50
    %v53 = vld [vmem:[%s4 + $0x49] sm:$0x1]
    %v54 = vlaneseq
    %v55 = vshrl.u32 %v54, 7
    %v56 = vsub.s32 0, %v55
    %v57 = vrot.slane %v53, %v56
    %v58 = vadd.f32 %v51, %v57
    %v59 = vadd.f32 %v52, %v57
    %v60 = vxor.u32 %v58, 2147483648
    %v61 = vxor.u32 %v59, 2147483648
    %v62 = vmul.f32 %v60, 1.442695
    %v63 = vpow.pop %v62
    %v64 = vmul.f32 %v61, 1.442695
    %v65 = vpow.pop %v64
    %v66 = vadd.f32 %v63, 1.0
    %v67 = vadd.f32 %v65, 1.0
    %v68 = vrcp.pop %v66
    %v69 = vmul.f32 1.0, %v68
    %v70 = vrcp.pop %v67
    %v71 = vmul.f32 1.0, %v70
    %v72 = vmul.f32 %v58, %v69
    %v73 = vmul.f32 %v59, %v71
    %v74 = vld [vmem:[%s4] sm:$0xff]
    %v75 = vld [vmem:[%s4 + $0x8] sm:$0xff]
    %v76 = vld [vmem:[%s4 + $0x10] sm:$0xff]
    %v77 = vld [vmem:[%s4 + $0x18] sm:$0xff]
    %v78 = vld [vmem:[%s4 + $0x20] sm:$0xff]
    %v79 = vld [vmem:[%s4 + $0x28] sm:$0xff]
    %v80 = vld [vmem:[%s4 + $0x30] sm:$0xff]
    %v81 = vld [vmem:[%s4 + $0x38] sm:$0xff]
    %v82 = vld [vmem:[%s4 + $0x4a] sm:$0x1]
    %v83 = vlaneseq
    %v84 = vshrl.u32 %v83, 7
    %v85 = vsub.s32 0, %v84
    %v86 = vrot.slane %v82, %v85
    %vm87 = vcmask 523264
    %v89 = vsel %vm87, %v72, 0
    %v92 = vsel %vm87, %v73, 0
    %94 = vmatprep.subr.mxu0 0.0
    %95 = vmatpush1.msra.mxu0 %v74
    %96 = vmatprep.subr.mxu0 0.0
    %97 = vmatpush1.msra.mxu0 %v75
    %98 = vmatprep.subr.mxu0 0.0
    %99 = vmatpush1.msra.mxu0 %v76
    %100 = vmatprep.subr.mxu0 0.0
    %101 = vmatpush1.msra.mxu0 %v77
    %102 = vmatprep.subr.mxu0 0.0
    %103 = vmatpush1.msra.mxu0 %v78
    %104 = vmatprep.subr.mxu0 0.0
    %105 = vmatpush1.msra.mxu0 %v79
    %106 = vmatprep.subr.mxu0 0.0
    %107 = vmatpush1.msra.mxu0 %v80
    %108 = vmatprep.subr.mxu0 0.0
    %109 = vmatpush1.msra.mxu0 %v81
    %110 = vmatprep.subr.mxu0 0.0
    %111 = vmatpush1.msra.mxu0 0.0
    %112 = vmatprep.subr.mxu0 0.0
    %113 = vmatpush1.msra.mxu0 0.0
    %114 = vmatprep.subr.mxu0 0.0
    %115 = vmatpush1.msra.mxu0 0.0
    %116 = vmatprep.subr.mxu0 0.0
    %117 = vmatpush1.msra.mxu0 0.0
    %118 = vmatprep.subr.mxu0 0.0
    %119 = vmatpush1.msra.mxu0 0.0
    %120 = vmatprep.subr.mxu0 0.0
    %121 = vmatpush1.msra.mxu0 0.0
    %122 = vmatprep.subr.mxu0 0.0
    %123 = vmatpush1.msra.mxu0 0.0
    %124 = vmatprep.subr.mxu0 0.0
    %125 = vmatpush1.msra.mxu0 0.0
    %126 = vmatprep.subr.mxu0 0.0
    %127 = vmatpush1.msra.mxu0 0.0
    %128 = vmatprep.subr.mxu0 0.0
    %129 = vmatpush1.msra.mxu0 0.0
    %130 = vmatprep.subr.mxu0 0.0
    %131 = vmatpush1.msra.mxu0 0.0
    %132 = vmatprep.subr.mxu0 0.0
    %133 = vmatpush1.msra.mxu0 0.0
    %134 = vmatprep.subr.mxu0 0.0
    %135 = vmatpush1.msra.mxu0 0.0
    %136 = vmatprep.subr.mxu0 0.0
    %137 = vmatpush1.msra.mxu0 0.0
    %138 = vmatprep.subr.mxu0 0.0
    %139 = vmatpush1.msra.mxu0 0.0
    %140 = vmatprep.subr.mxu0 0.0
    %141 = vmatpush1.msra.mxu0 0.0
    %142 = vmatprep.subr.mxu0 0.0
    %143 = vmatpush1.msra.mxu0 0.0
    %144 = vmatprep.subr.mxu0 0.0
    %145 = vmatpush1.msra.mxu0 0.0
    %146 = vmatprep.subr.mxu0 0.0
    %147 = vmatpush1.msra.mxu0 0.0
    %148 = vmatprep.subr.mxu0 0.0
    %149 = vmatpush1.msra.mxu0 0.0
    %150 = vmatprep.subr.mxu0 0.0
    %151 = vmatpush1.msra.mxu0 0.0
    %152 = vmatprep.subr.mxu0 0.0
    %153 = vmatpush1.msra.mxu0 0.0
    %154 = vmatprep.subr.mxu0 0.0
    %155 = vmatpush1.msra.mxu0 0.0
    %156 = vmatprep.subr.mxu0 0.0
    %157 = vmatpush1.msra.mxu0 0.0
    %158 = vmatprep.mubr.f32.mxu0 0.0
    %159 = vmatmul.mubr.f32.gmra.mrb[0].mxu0 %v89
    %v160 = vpop.f32.mrb[0].mxu0
    %v161 = vadd.f32 %v86, %v160
    %v162 = vpop.f32.mrb[0].mxu0
    %163 = vmatprep.mubr.f32.mxu0 0.0
    %164 = vmatmul.mubr.f32.gmra.mrb[0].mxu0 %v92
    %v165 = vpop.f32.mrb[0].mxu0
    %v166 = vadd.f32 %v86, %v165
    %v167 = vpop.f32.mrb[0].mxu0
    %168 = vdwg.mxu0
    %v169 = vxor.u32 %v161, 2147483648
    %v170 = vxor.u32 %v166, 2147483648
    %v171 = vmul.f32 %v169, 1.442695
    %v172 = vpow.pop %v171
    %v173 = vmul.f32 %v170, 1.442695
    %v174 = vpow.pop %v173
    %v175 = vadd.f32 %v172, 1.0
    %v176 = vadd.f32 %v174, 1.0
    %v177 = vrcp.pop %v175
    %v178 = vmul.f32 1.0, %v177
    %v179 = vrcp.pop %v176
    %v180 = vmul.f32 1.0, %v179
    %v181 = vmul.f32 %v161, %v178
    %v182 = vmul.f32 %v166, %v180
    %v183 = vld [vmem:[#allocation2] sm:$0xff]
    %v184 = vld [vmem:[#allocation2 + $0x8] sm:$0xff]
    %v185 = vld [vmem:[#allocation2 + $0x10] sm:$0xff]
    %v186 = vld [vmem:[#allocation2 + $0x18] sm:$0xff]
    %v187 = vld [vmem:[#allocation2 + $0x20] sm:$0xff]
    %v188 = vld [vmem:[#allocation2 + $0x28] sm:$0xff]
    %v189 = vld [vmem:[#allocation2 + $0x30] sm:$0xff]
    %v190 = vld [vmem:[#allocation2 + $0x38] sm:$0xff]
    %v191 = vld [vmem:[#allocation2 + $0x40] sm:$0xff]
    %v192 = vld [vmem:[#allocation2 + $0x48] sm:$0xff]
    %v193 = vld [vmem:[#allocation2 + $0x50] sm:$0xff]
    %v194 = vld [vmem:[#allocation2 + $0x58] sm:$0xff]
    %v195 = vld [vmem:[#allocation2 + $0x60] sm:$0xff]
    %v196 = vld [vmem:[#allocation2 + $0x68] sm:$0xff]
    %v197 = vld [vmem:[#allocation2 + $0x70] sm:$0xff]
    %v198 = vld [vmem:[#allocation2 + $0x78] sm:$0xff]
    %s199 = scalar_lea.vmem [#allocation2], 128
    %v200 = vld [vmem:[%s199] ss:$8 sm:$0x3]
    %v202 = vlaneseq
    %v203 = vshrl.u32 %v202, 7
    %v204 = vsub.s32 0, %v203
    %v205 = vrot.slane %v200, %v204
    %v206 = vlaneseq
    %v207 = vshrl.u32 %v206, 7
    %v208 = vsub.s32 1, %v207
    %v209 = vrot.slane %v200, %v208
    %v213 = vsel %vm87, %v181, 0
    %v216 = vsel %vm87, %v182, 0
    %218 = vmatprep.subr.mxu0 %v184
    %219 = vmatpush1.msra.mxu0 %v183
    %220 = vmatprep.subr.mxu0 %v186
    %221 = vmatpush1.msra.mxu0 %v185
    %222 = vmatprep.subr.mxu0 %v188
    %223 = vmatpush1.msra.mxu0 %v187
    %224 = vmatprep.subr.mxu0 %v190
    %225 = vmatpush1.msra.mxu0 %v189
    %226 = vmatprep.subr.mxu0 %v192
    %227 = vmatpush1.msra.mxu0 %v191
    %228 = vmatprep.subr.mxu0 %v194
    %229 = vmatpush1.msra.mxu0 %v193
    %230 = vmatprep.subr.mxu0 %v196
    %231 = vmatpush1.msra.mxu0 %v195
    %232 = vmatprep.subr.mxu0 %v198
    %233 = vmatpush1.msra.mxu0 %v197
    %234 = vmatprep.subr.mxu0 0.0
    %235 = vmatpush1.msra.mxu0 0.0
    %236 = vmatprep.subr.mxu0 0.0
    %237 = vmatpush1.msra.mxu0 0.0
    %238 = vmatprep.subr.mxu0 0.0
    %239 = vmatpush1.msra.mxu0 0.0
    %240 = vmatprep.subr.mxu0 0.0
    %241 = vmatpush1.msra.mxu0 0.0
    %242 = vmatprep.subr.mxu0 0.0
    %243 = vmatpush1.msra.mxu0 0.0
    %244 = vmatprep.subr.mxu0 0.0
    %245 = vmatpush1.msra.mxu0 0.0
    %246 = vmatprep.subr.mxu0 0.0
    %247 = vmatpush1.msra.mxu0 0.0
    %248 = vmatprep.subr.mxu0 0.0
    %249 = vmatpush1.msra.mxu0 0.0
    %250 = vmatprep.subr.mxu0 0.0
    %251 = vmatpush1.msra.mxu0 0.0
    %252 = vmatprep.subr.mxu0 0.0
    %253 = vmatpush1.msra.mxu0 0.0
    %254 = vmatprep.subr.mxu0 0.0
    %255 = vmatpush1.msra.mxu0 0.0
    %256 = vmatprep.subr.mxu0 0.0
    %257 = vmatpush1.msra.mxu0 0.0
    %258 = vmatprep.subr.mxu0 0.0
    %259 = vmatpush1.msra.mxu0 0.0
    %260 = vmatprep.subr.mxu0 0.0
    %261 = vmatpush1.msra.mxu0 0.0
    %262 = vmatprep.subr.mxu0 0.0
    %263 = vmatpush1.msra.mxu0 0.0
    %264 = vmatprep.subr.mxu0 0.0
    %265 = vmatpush1.msra.mxu0 0.0
    %266 = vmatprep.subr.mxu0 0.0
    %267 = vmatpush1.msra.mxu0 0.0
    %268 = vmatprep.subr.mxu0 0.0
    %269 = vmatpush1.msra.mxu0 0.0
    %270 = vmatprep.subr.mxu0 0.0
    %271 = vmatpush1.msra.mxu0 0.0
    %272 = vmatprep.subr.mxu0 0.0
    %273 = vmatpush1.msra.mxu0 0.0
    %274 = vmatprep.subr.mxu0 0.0
    %275 = vmatpush1.msra.mxu0 0.0
    %276 = vmatprep.subr.mxu0 0.0
    %277 = vmatpush1.msra.mxu0 0.0
    %278 = vmatprep.subr.mxu0 0.0
    %279 = vmatpush1.msra.mxu0 0.0
    %280 = vmatprep.subr.mxu0 0.0
    %281 = vmatpush1.msra.mxu0 0.0
    %282 = vmatprep.mubr.f32.mxu0 0.0
    %283 = vmatmul.mubr.f32.gmra.mrb[0].mxu0 %v213
    %v284 = vpop.f32.mrb[0].mxu0
    %v285 = vadd.f32 %v205, %v284
    %v286 = vpop.f32.mrb[0].mxu0
    %v287 = vadd.f32 %v209, %v286
    %288 = vmatprep.mubr.f32.mxu0 0.0
    %289 = vmatmul.mubr.f32.gmra.mrb[0].mxu0 %v216
    %v290 = vpop.f32.mrb[0].mxu0
    %v291 = vadd.f32 %v205, %v290
    %v292 = vpop.f32.mrb[0].mxu0
    %v293 = vadd.f32 %v209, %v292
    %294 = vdwg.mxu0
    %v295 = vld [vmem:[%s4 + $0x40] sm:$0xff]
    %v296 = vld [vmem:[%s4 + $0x4b] sm:$0x1]
    %v297 = vlaneseq
    %v298 = vshrl.u32 %v297, 7
    %v299 = vsub.s32 0, %v298
    %v300 = vrot.slane %v296, %v299
    %vm301 = vcmask 64512
    %v302 = vsel %vm301, %v34, 0
    %v304 = vsel %vm301, %v35, 0
    %306 = vmatprep.subr.mxu0 0.0
    %307 = vmatpush1.msra.mxu0 %v295
    %308 = vmatprep.subr.mxu0 0.0
    %309 = vmatpush1.msra.mxu0 0.0
    %310 = vmatprep.subr.mxu0 0.0
    %311 = vmatpush1.msra.mxu0 0.0
    %312 = vmatprep.subr.mxu0 0.0
    %313 = vmatpush1.msra.mxu0 0.0
    %314 = vmatprep.subr.mxu0 0.0
    %315 = vmatpush1.msra.mxu0 0.0
    %316 = vmatprep.subr.mxu0 0.0
    %317 = vmatpush1.msra.mxu0 0.0
    %318 = vmatprep.subr.mxu0 0.0
    %319 = vmatpush1.msra.mxu0 0.0
    %320 = vmatprep.subr.mxu0 0.0
    %321 = vmatpush1.msra.mxu0 0.0
    %322 = vmatprep.subr.mxu0 0.0
    %323 = vmatpush1.msra.mxu0 0.0
    %324 = vmatprep.subr.mxu0 0.0
    %325 = vmatpush1.msra.mxu0 0.0
    %326 = vmatprep.subr.mxu0 0.0
    %327 = vmatpush1.msra.mxu0 0.0
    %328 = vmatprep.subr.mxu0 0.0
    %329 = vmatpush1.msra.mxu0 0.0
    %330 = vmatprep.subr.mxu0 0.0
    %331 = vmatpush1.msra.mxu0 0.0
    %332 = vmatprep.subr.mxu0 0.0
    %333 = vmatpush1.msra.mxu0 0.0
    %334 = vmatprep.subr.mxu0 0.0
    %335 = vmatpush1.msra.mxu0 0.0
    %336 = vmatprep.subr.mxu0 0.0
    %337 = vmatpush1.msra.mxu0 0.0
    %338 = vmatprep.subr.mxu0 0.0
    %339 = vmatpush1.msra.mxu0 0.0
    %340 = vmatprep.subr.mxu0 0.0
    %341 = vmatpush1.msra.mxu0 0.0
    %342 = vmatprep.subr.mxu0 0.0
    %343 = vmatpush1.msra.mxu0 0.0
    %344 = vmatprep.subr.mxu0 0.0
    %345 = vmatpush1.msra.mxu0 0.0
    %346 = vmatprep.subr.mxu0 0.0
    %347 = vmatpush1.msra.mxu0 0.0
    %348 = vmatprep.subr.mxu0 0.0
    %349 = vmatpush1.msra.mxu0 0.0
    %350 = vmatprep.subr.mxu0 0.0
    %351 = vmatpush1.msra.mxu0 0.0
    %352 = vmatprep.subr.mxu0 0.0
    %353 = vmatpush1.msra.mxu0 0.0
    %354 = vmatprep.subr.mxu0 0.0
    %355 = vmatpush1.msra.mxu0 0.0
    %356 = vmatprep.subr.mxu0 0.0
    %357 = vmatpush1.msra.mxu0 0.0
    %358 = vmatprep.subr.mxu0 0.0
    %359 = vmatpush1.msra.mxu0 0.0
    %360 = vmatprep.subr.mxu0 0.0
    %361 = vmatpush1.msra.mxu0 0.0
    %362 = vmatprep.subr.mxu0 0.0
    %363 = vmatpush1.msra.mxu0 0.0
    %364 = vmatprep.subr.mxu0 0.0
    %365 = vmatpush1.msra.mxu0 0.0
    %366 = vmatprep.subr.mxu0 0.0
    %367 = vmatpush1.msra.mxu0 0.0
    %368 = vmatprep.subr.mxu0 0.0
    %369 = vmatpush1.msra.mxu0 0.0
    %370 = vmatprep.mubr.f32.mxu0 0.0
    %371 = vmatmul.mubr.f32.gmra.mrb[0].mxu0 %v302
    %v372 = vpop.f32.mrb[0].mxu0
    %v373 = vadd.f32 %v300, %v372
    %v374 = vpop.f32.mrb[0].mxu0
    %375 = vmatprep.mubr.f32.mxu0 0.0
    %376 = vmatmul.mubr.f32.gmra.mrb[0].mxu0 %v304
    %v377 = vpop.f32.mrb[0].mxu0
    %v378 = vadd.f32 %v300, %v377
    %v379 = vpop.f32.mrb[0].mxu0
    %380 = vdwg.mxu0
    %v381 = vld [vmem:[%s4 + $0x4c] sm:$0x1]
    %v382 = vld [vmem:[%s4 + $0x4d] sm:$0x1]
    %v383 = vsel %vm87, %v373, 0.0
    %384 = vadd.xlane.f32.xlu0 %v383
    %v385 = vpop.xlane.xlu0 %384
    %v386 = vsel %vm87, %v378, 0.0
    %387 = vadd.xlane.f32.xlu0 %v386
    %v388 = vpop.xlane.xlu0 %387
    %v389 = vrcp.pop 64.0
    %v390 = vmul.f32 %v385, %v389
    %v391 = vmul.f32 %v388, %v389
    %v392 = vmul.f32 %v373, %v373
    %v393 = vmul.f32 %v378, %v378
    %v394 = vsel %vm87, %v392, 0.0
    %395 = vadd.xlane.f32.xlu0 %v394
    %v396 = vpop.xlane.xlu0 %395
    %v397 = vsel %vm87, %v393, 0.0
    %398 = vadd.xlane.f32.xlu0 %v397
    %v399 = vpop.xlane.xlu0 %398
    %v400 = vmul.f32 %v396, %v389
    %v401 = vmul.f32 %v399, %v389
    %v402 = vmul.f32 %v390, %v390
    %v403 = vmul.f32 %v391, %v391
    %v404 = vsub.f32 %v400, %v402
    %v405 = vsub.f32 %v401, %v403
    %v406 = vsub.f32 %v373, %v390
    %v407 = vsub.f32 %v378, %v391
    %v408 = vadd.f32 %v404, 1e-05
    %v409 = vadd.f32 %v405, 1e-05
    %v410 = vrsqrt.pop %v408
    %v411 = vrsqrt.pop %v409
    %v412 = vmul.f32 %v406, %v410
    %v413 = vmul.f32 %v407, %v411
    %v414 = vlaneseq
    %v415 = vshrl.u32 %v414, 7
    %v416 = vsub.s32 0, %v415
    %v417 = vrot.slane %v381, %v416
    %v418 = vmul.f32 %v412, %v417
    %v419 = vmul.f32 %v413, %v417
    %v420 = vlaneseq
    %v421 = vshrl.u32 %v420, 7
    %v422 = vsub.s32 0, %v421
    %v423 = vrot.slane %v382, %v422
    %v424 = vadd.f32 %v418, %v423
    %v425 = vadd.f32 %v419, %v423
    %v426 = vxor.u32 %v424, 2147483648
    %v427 = vxor.u32 %v425, 2147483648
    %v428 = vmul.f32 %v426, 1.442695
    %v429 = vpow.pop %v428
    %v430 = vmul.f32 %v427, 1.442695
    %v431 = vpow.pop %v430
    %v432 = vadd.f32 %v429, 1.0
    %v433 = vadd.f32 %v431, 1.0
    %v434 = vrcp.pop %v432
    %v435 = vmul.f32 1.0, %v434
    %v436 = vrcp.pop %v433
    %v437 = vmul.f32 1.0, %v436
    %v438 = vmul.f32 %v424, %v435
    %v439 = vmul.f32 %v425, %v437
    %v440 = vld [vmem:[%s1] sm:$0xff]
    %v441 = vld [vmem:[%s1 + $0x8] sm:$0xff]
    %v442 = vld [vmem:[%s1 + $0x10] sm:$0xff]
    %v443 = vld [vmem:[%s1 + $0x18] sm:$0xff]
    %v444 = vld [vmem:[%s1 + $0x20] sm:$0xff]
    %v445 = vld [vmem:[%s1 + $0x28] sm:$0xff]
    %v446 = vld [vmem:[%s1 + $0x30] sm:$0xff]
    %v447 = vld [vmem:[%s1 + $0x38] sm:$0xff]
    %v449 = vsel %vm87, %v438, 0
    %v452 = vsel %vm87, %v439, 0
    %454 = vmatprep.subr.mxu0 0.0
    %455 = vmatpush1.msra.mxu0 %v440
    %456 = vmatprep.subr.mxu0 0.0
    %457 = vmatpush1.msra.mxu0 %v441
    %458 = vmatprep.subr.mxu0 0.0
    %459 = vmatpush1.msra.mxu0 %v442
    %460 = vmatprep.subr.mxu0 0.0
    %461 = vmatpush1.msra.mxu0 %v443
    %462 = vmatprep.subr.mxu0 0.0
    %463 = vmatpush1.msra.mxu0 %v444
    %464 = vmatprep.subr.mxu0 0.0
    %465 = vmatpush1.msra.mxu0 %v445
    %466 = vmatprep.subr.mxu0 0.0
    %467 = vmatpush1.msra.mxu0 %v446
    %468 = vmatprep.subr.mxu0 0.0
    %469 = vmatpush1.msra.mxu0 %v447
    %470 = vmatprep.subr.mxu0 0.0
    %471 = vmatpush1.msra.mxu0 0.0
    %472 = vmatprep.subr.mxu0 0.0
    %473 = vmatpush1.msra.mxu0 0.0
    %474 = vmatprep.subr.mxu0 0.0
    %475 = vmatpush1.msra.mxu0 0.0
    %476 = vmatprep.subr.mxu0 0.0
    %477 = vmatpush1.msra.mxu0 0.0
    %478 = vmatprep.subr.mxu0 0.0
    %479 = vmatpush1.msra.mxu0 0.0
    %480 = vmatprep.subr.mxu0 0.0
    %481 = vmatpush1.msra.mxu0 0.0
    %482 = vmatprep.subr.mxu0 0.0
    %483 = vmatpush1.msra.mxu0 0.0
    %484 = vmatprep.subr.mxu0 0.0
    %485 = vmatpush1.msra.mxu0 0.0
    %486 = vmatprep.subr.mxu0 0.0
    %487 = vmatpush1.msra.mxu0 0.0
    %488 = vmatprep.subr.mxu0 0.0
    %489 = vmatpush1.msra.mxu0 0.0
    %490 = vmatprep.subr.mxu0 0.0
    %491 = vmatpush1.msra.mxu0 0.0
    %492 = vmatprep.subr.mxu0 0.0
    %493 = vmatpush1.msra.mxu0 0.0
    %494 = vmatprep.subr.mxu0 0.0
    %495 = vmatpush1.msra.mxu0 0.0
    %496 = vmatprep.subr.mxu0 0.0
    %497 = vmatpush1.msra.mxu0 0.0
    %498 = vmatprep.subr.mxu0 0.0
    %499 = vmatpush1.msra.mxu0 0.0
    %500 = vmatprep.subr.mxu0 0.0
    %501 = vmatpush1.msra.mxu0 0.0
    %502 = vmatprep.subr.mxu0 0.0
    %503 = vmatpush1.msra.mxu0 0.0
    %504 = vmatprep.subr.mxu0 0.0
    %505 = vmatpush1.msra.mxu0 0.0
    %506 = vmatprep.subr.mxu0 0.0
    %507 = vmatpush1.msra.mxu0 0.0
    %508 = vmatprep.subr.mxu0 0.0
    %509 = vmatpush1.msra.mxu0 0.0
    %510 = vmatprep.subr.mxu0 0.0
    %511 = vmatpush1.msra.mxu0 0.0
    %512 = vmatprep.subr.mxu0 0.0
    %513 = vmatpush1.msra.mxu0 0.0
    %514 = vmatprep.subr.mxu0 0.0
    %515 = vmatpush1.msra.mxu0 0.0
    %516 = vmatprep.subr.mxu0 0.0
    %517 = vmatpush1.msra.mxu0 0.0
    %518 = vmatprep.mubr.f32.mxu0 0.0
    %519 = vmatmul.mubr.f32.gmra.mrb[0].mxu0 %v449
    %v520 = vpop.f32.mrb[0].mxu0
    %v521 = vadd.f32 %v285, %v520
    %v522 = vpop.f32.mrb[0].mxu0
    %523 = vmatprep.mubr.f32.mxu0 0.0
    %524 = vmatmul.mubr.f32.gmra.mrb[0].mxu0 %v452
    %v525 = vpop.f32.mrb[0].mxu0
    %v526 = vadd.f32 %v291, %v525
    %v527 = vpop.f32.mrb[0].mxu0
    %528 = vdwg.mxu0
    %v529 = vld [vmem:[%s4 + $0x4e] sm:$0x1]
    %v530 = vld [vmem:[%s4 + $0x51] sm:$0x1]
    %v531 = vsel %vm87, %v521, 0.0
    %532 = vadd.xlane.f32.xlu0 %v531
    %v533 = vpop.xlane.xlu0 %532
    %v534 = vsel %vm87, %v526, 0.0
    %535 = vadd.xlane.f32.xlu0 %v534
    %v536 = vpop.xlane.xlu0 %535
    %v537 = vmul.f32 %v533, %v389
    %v538 = vmul.f32 %v536, %v389
    %v539 = vmul.f32 %v521, %v521
    %v540 = vmul.f32 %v526, %v526
    %v541 = vsel %vm87, %v539, 0.0
    %542 = vadd.xlane.f32.xlu0 %v541
    %v543 = vpop.xlane.xlu0 %542
    %v544 = vsel %vm87, %v540, 0.0
    %545 = vadd.xlane.f32.xlu0 %v544
    %v546 = vpop.xlane.xlu0 %545
    %v547 = vmul.f32 %v543, %v389
    %v548 = vmul.f32 %v546, %v389
    %v549 = vmul.f32 %v537, %v537
    %v550 = vmul.f32 %v538, %v538
    %v551 = vsub.f32 %v547, %v549
    %v552 = vsub.f32 %v548, %v550
    %v553 = vsub.f32 %v521, %v537
    %v554 = vsub.f32 %v526, %v538
    %v555 = vadd.f32 %v551, 1e-05
    %v556 = vadd.f32 %v552, 1e-05
    %v557 = vrsqrt.pop %v555
    %v558 = vrsqrt.pop %v556
    %v559 = vmul.f32 %v553, %v557
    %v560 = vmul.f32 %v554, %v558
    %v561 = vlaneseq
    %v562 = vshrl.u32 %v561, 7
    %v563 = vsub.s32 0, %v562
    %v564 = vrot.slane %v529, %v563
    %v565 = vmul.f32 %v559, %v564
    %v566 = vmul.f32 %v560, %v564
    %v567 = vlaneseq
    %v568 = vshrl.u32 %v567, 7
    %v569 = vsub.s32 0, %v568
    %v570 = vrot.slane %v530, %v569
    %v571 = vadd.f32 %v565, %v570
    %v572 = vadd.f32 %v566, %v570
    %v573 = vxor.u32 %v571, 2147483648
    %v574 = vxor.u32 %v572, 2147483648
    %v575 = vmul.f32 %v573, 1.442695
    %v576 = vpow.pop %v575
    %v577 = vmul.f32 %v574, 1.442695
    %v578 = vpow.pop %v577
    %v579 = vadd.f32 %v576, 1.0
    %v580 = vadd.f32 %v578, 1.0
    %v581 = vrcp.pop %v579
    %v582 = vmul.f32 1.0, %v581
    %v583 = vrcp.pop %v580
    %v584 = vmul.f32 1.0, %v583
    %v585 = vmul.f32 %v571, %v582
    %v586 = vmul.f32 %v572, %v584
    %v587 = vadd.f32 %v585, %v438
    %v588 = vadd.f32 %v586, %v439
    %s589 = scalar_lea.vmem %s1, 64
    %v590 = vld [vmem:[%s589] sm:$0xff]
    %v591 = vld [vmem:[%s589 + $0x8] sm:$0xff]
    %v592 = vld [vmem:[%s589 + $0x10] sm:$0xff]
    %v593 = vld [vmem:[%s589 + $0x18] sm:$0xff]
    %v594 = vld [vmem:[%s589 + $0x20] sm:$0xff]
    %v595 = vld [vmem:[%s589 + $0x28] sm:$0xff]
    %v596 = vld [vmem:[%s589 + $0x30] sm:$0xff]
    %v597 = vld [vmem:[%s589 + $0x38] sm:$0xff]
    %600 = vrot.lane.b32.xlu0 %v285, 64
    %v601 = vpop.permute.xlu0 %600
    %602 = vrot.lane.b32.xlu0 %v291, 64
    %v603 = vpop.permute.xlu0 %602
    %v607 = vsel %vm87, %v587, 0
    %v610 = vsel %vm87, %v588, 0
    %612 = vmatprep.subr.mxu0 0.0
    %613 = vmatpush1.msra.mxu0 %v590
    %614 = vmatprep.subr.mxu0 0.0
    %615 = vmatpush1.msra.mxu0 %v591
    %616 = vmatprep.subr.mxu0 0.0
    %617 = vmatpush1.msra.mxu0 %v592
    %618 = vmatprep.subr.mxu0 0.0
    %619 = vmatpush1.msra.mxu0 %v593
    %620 = vmatprep.subr.mxu0 0.0
    %621 = vmatpush1.msra.mxu0 %v594
    %622 = vmatprep.subr.mxu0 0.0
    %623 = vmatpush1.msra.mxu0 %v595
    %624 = vmatprep.subr.mxu0 0.0
    %625 = vmatpush1.msra.mxu0 %v596
    %626 = vmatprep.subr.mxu0 0.0
    %627 = vmatpush1.msra.mxu0 %v597
    %628 = vmatprep.subr.mxu0 0.0
    %629 = vmatpush1.msra.mxu0 0.0
    %630 = vmatprep.subr.mxu0 0.0
    %631 = vmatpush1.msra.mxu0 0.0
    %632 = vmatprep.subr.mxu0 0.0
    %633 = vmatpush1.msra.mxu0 0.0
    %634 = vmatprep.subr.mxu0 0.0
    %635 = vmatpush1.msra.mxu0 0.0
    %636 = vmatprep.subr.mxu0 0.0
    %637 = vmatpush1.msra.mxu0 0.0
    %638 = vmatprep.subr.mxu0 0.0
    %639 = vmatpush1.msra.mxu0 0.0
    %640 = vmatprep.subr.mxu0 0.0
    %641 = vmatpush1.msra.mxu0 0.0
    %642 = vmatprep.subr.mxu0 0.0
    %643 = vmatpush1.msra.mxu0 0.0
    %644 = vmatprep.subr.mxu0 0.0
    %645 = vmatpush1.msra.mxu0 0.0
    %646 = vmatprep.subr.mxu0 0.0
    %647 = vmatpush1.msra.mxu0 0.0
    %648 = vmatprep.subr.mxu0 0.0
    %649 = vmatpush1.msra.mxu0 0.0
    %650 = vmatprep.subr.mxu0 0.0
    %651 = vmatpush1.msra.mxu0 0.0
    %652 = vmatprep.subr.mxu0 0.0
    %653 = vmatpush1.msra.mxu0 0.0
    %654 = vmatprep.subr.mxu0 0.0
    %655 = vmatpush1.msra.mxu0 0.0
    %656 = vmatprep.subr.mxu0 0.0
    %657 = vmatpush1.msra.mxu0 0.0
    %658 = vmatprep.subr.mxu0 0.0
    %659 = vmatpush1.msra.mxu0 0.0
    %660 = vmatprep.subr.mxu0 0.0
    %661 = vmatpush1.msra.mxu0 0.0
    %662 = vmatprep.subr.mxu0 0.0
    %663 = vmatpush1.msra.mxu0 0.0
    %664 = vmatprep.subr.mxu0 0.0
    %665 = vmatpush1.msra.mxu0 0.0
    %666 = vmatprep.subr.mxu0 0.0
    %667 = vmatpush1.msra.mxu0 0.0
    %668 = vmatprep.subr.mxu0 0.0
    %669 = vmatpush1.msra.mxu0 0.0
    %670 = vmatprep.subr.mxu0 0.0
    %671 = vmatpush1.msra.mxu0 0.0
    %672 = vmatprep.subr.mxu0 0.0
    %673 = vmatpush1.msra.mxu0 0.0
    %674 = vmatprep.subr.mxu0 0.0
    %675 = vmatpush1.msra.mxu0 0.0
    %676 = vmatprep.mubr.f32.mxu0 0.0
    %677 = vmatmul.mubr.f32.gmra.mrb[0].mxu0 %v607
    %v678 = vpop.f32.mrb[0].mxu0
    %v679 = vadd.f32 %v601, %v678
    %v680 = vpop.f32.mrb[0].mxu0
    %681 = vmatprep.mubr.f32.mxu0 0.0
    %682 = vmatmul.mubr.f32.gmra.mrb[0].mxu0 %v610
    %v683 = vpop.f32.mrb[0].mxu0
    %v684 = vadd.f32 %v603, %v683
    %v685 = vpop.f32.mrb[0].mxu0
    %686 = vdwg.mxu0
    %v687 = vld [vmem:[%s4 + $0x4f] sm:$0x1]
    %v688 = vld [vmem:[%s4 + $0x52] sm:$0x1]
    %v689 = vsel %vm87, %v679, 0.0
    %690 = vadd.xlane.f32.xlu0 %v689
    %v691 = vpop.xlane.xlu0 %690
    %v692 = vsel %vm87, %v684, 0.0
    %693 = vadd.xlane.f32.xlu0 %v692
    %v694 = vpop.xlane.xlu0 %693
    %v695 = vmul.f32 %v691, %v389
    %v696 = vmul.f32 %v694, %v389
    %v697 = vmul.f32 %v679, %v679
    %v698 = vmul.f32 %v684, %v684
    %v699 = vsel %vm87, %v697, 0.0
    %700 = vadd.xlane.f32.xlu0 %v699
    %v701 = vpop.xlane.xlu0 %700
    %v702 = vsel %vm87, %v698, 0.0
    %703 = vadd.xlane.f32.xlu0 %v702
    %v704 = vpop.xlane.xlu0 %703
    %v705 = vmul.f32 %v701, %v389
    %v706 = vmul.f32 %v704, %v389
    %v707 = vmul.f32 %v695, %v695
    %v708 = vmul.f32 %v696, %v696
    %v709 = vsub.f32 %v705, %v707
    %v710 = vsub.f32 %v706, %v708
    %v711 = vsub.f32 %v679, %v695
    %v712 = vsub.f32 %v684, %v696
    %v713 = vadd.f32 %v709, 1e-05
    %v714 = vadd.f32 %v710, 1e-05
    %v715 = vrsqrt.pop %v713
    %v716 = vrsqrt.pop %v714
    %v717 = vmul.f32 %v711, %v715
    %v718 = vmul.f32 %v712, %v716
    %v719 = vlaneseq
    %v720 = vshrl.u32 %v719, 7
    %v721 = vsub.s32 0, %v720
    %v722 = vrot.slane %v687, %v721
    %v723 = vmul.f32 %v717, %v722
    %v724 = vmul.f32 %v718, %v722
    %v725 = vlaneseq
    %v726 = vshrl.u32 %v725, 7
    %v727 = vsub.s32 0, %v726
    %v728 = vrot.slane %v688, %v727
    %v729 = vadd.f32 %v723, %v728
    %v730 = vadd.f32 %v724, %v728
    %v731 = vxor.u32 %v729, 2147483648
    %v732 = vxor.u32 %v730, 2147483648
    %v733 = vmul.f32 %v731, 1.442695
    %v734 = vpow.pop %v733
    %v735 = vmul.f32 %v732, 1.442695
    %v736 = vpow.pop %v735
    %v737 = vadd.f32 %v734, 1.0
    %v738 = vadd.f32 %v736, 1.0
    %v739 = vrcp.pop %v737
    %v740 = vmul.f32 1.0, %v739
    %v741 = vrcp.pop %v738
    %v742 = vmul.f32 1.0, %v741
    %v743 = vmul.f32 %v729, %v740
    %v744 = vmul.f32 %v730, %v742
    %v745 = vadd.f32 %v743, %v587
    %v746 = vadd.f32 %v744, %v588
    %s747 = scalar_lea.vmem %s1, 128
    %v748 = vld [vmem:[%s747] sm:$0xff]
    %v749 = vld [vmem:[%s747 + $0x8] sm:$0xff]
    %v750 = vld [vmem:[%s747 + $0x10] sm:$0xff]
    %v751 = vld [vmem:[%s747 + $0x18] sm:$0xff]
    %v752 = vld [vmem:[%s747 + $0x20] sm:$0xff]
    %v753 = vld [vmem:[%s747 + $0x28] sm:$0xff]
    %v754 = vld [vmem:[%s747 + $0x30] sm:$0xff]
    %v755 = vld [vmem:[%s747 + $0x38] sm:$0xff]
    %v757 = vsel %vm87, %v745, 0
    %v760 = vsel %vm87, %v746, 0
    %762 = vmatprep.subr.mxu0 0.0
    %763 = vmatpush1.msra.mxu0 %v748
    %764 = vmatprep.subr.mxu0 0.0
    %765 = vmatpush1.msra.mxu0 %v749
    %766 = vmatprep.subr.mxu0 0.0
    %767 = vmatpush1.msra.mxu0 %v750
    %768 = vmatprep.subr.mxu0 0.0
    %769 = vmatpush1.msra.mxu0 %v751
    %770 = vmatprep.subr.mxu0 0.0
    %771 = vmatpush1.msra.mxu0 %v752
    %772 = vmatprep.subr.mxu0 0.0
    %773 = vmatpush1.msra.mxu0 %v753
    %774 = vmatprep.subr.mxu0 0.0
    %775 = vmatpush1.msra.mxu0 %v754
    %776 = vmatprep.subr.mxu0 0.0
    %777 = vmatpush1.msra.mxu0 %v755
    %778 = vmatprep.subr.mxu0 0.0
    %779 = vmatpush1.msra.mxu0 0.0
    %780 = vmatprep.subr.mxu0 0.0
    %781 = vmatpush1.msra.mxu0 0.0
    %782 = vmatprep.subr.mxu0 0.0
    %783 = vmatpush1.msra.mxu0 0.0
    %784 = vmatprep.subr.mxu0 0.0
    %785 = vmatpush1.msra.mxu0 0.0
    %786 = vmatprep.subr.mxu0 0.0
    %787 = vmatpush1.msra.mxu0 0.0
    %788 = vmatprep.subr.mxu0 0.0
    %789 = vmatpush1.msra.mxu0 0.0
    %790 = vmatprep.subr.mxu0 0.0
    %791 = vmatpush1.msra.mxu0 0.0
    %792 = vmatprep.subr.mxu0 0.0
    %793 = vmatpush1.msra.mxu0 0.0
    %794 = vmatprep.subr.mxu0 0.0
    %795 = vmatpush1.msra.mxu0 0.0
    %796 = vmatprep.subr.mxu0 0.0
    %797 = vmatpush1.msra.mxu0 0.0
    %798 = vmatprep.subr.mxu0 0.0
    %799 = vmatpush1.msra.mxu0 0.0
    %800 = vmatprep.subr.mxu0 0.0
    %801 = vmatpush1.msra.mxu0 0.0
    %802 = vmatprep.subr.mxu0 0.0
    %803 = vmatpush1.msra.mxu0 0.0
    %804 = vmatprep.subr.mxu0 0.0
    %805 = vmatpush1.msra.mxu0 0.0
    %806 = vmatprep.subr.mxu0 0.0
    %807 = vmatpush1.msra.mxu0 0.0
    %808 = vmatprep.subr.mxu0 0.0
    %809 = vmatpush1.msra.mxu0 0.0
    %810 = vmatprep.subr.mxu0 0.0
    %811 = vmatpush1.msra.mxu0 0.0
    %812 = vmatprep.subr.mxu0 0.0
    %813 = vmatpush1.msra.mxu0 0.0
    %814 = vmatprep.subr.mxu0 0.0
    %815 = vmatpush1.msra.mxu0 0.0
    %816 = vmatprep.subr.mxu0 0.0
    %817 = vmatpush1.msra.mxu0 0.0
    %818 = vmatprep.subr.mxu0 0.0
    %819 = vmatpush1.msra.mxu0 0.0
    %820 = vmatprep.subr.mxu0 0.0
    %821 = vmatpush1.msra.mxu0 0.0
    %822 = vmatprep.subr.mxu0 0.0
    %823 = vmatpush1.msra.mxu0 0.0
    %824 = vmatprep.subr.mxu0 0.0
    %825 = vmatpush1.msra.mxu0 0.0
    %826 = vmatprep.mubr.f32.mxu0 0.0
    %827 = vmatmul.mubr.f32.gmra.mrb[0].mxu0 %v757
    %v828 = vpop.f32.mrb[0].mxu0
    %v829 = vadd.f32 %v287, %v828
    %v830 = vpop.f32.mrb[0].mxu0
    %831 = vmatprep.mubr.f32.mxu0 0.0
    %832 = vmatmul.mubr.f32.gmra.mrb[0].mxu0 %v760
    %v833 = vpop.f32.mrb[0].mxu0
    %v834 = vadd.f32 %v293, %v833
    %v835 = vpop.f32.mrb[0].mxu0
    %836 = vdwg.mxu0
    %v837 = vld [vmem:[%s4 + $0x50] sm:$0x1]
    %v838 = vld [vmem:[%s4 + $0x53] sm:$0x1]
    %v839 = vsel %vm87, %v829, 0.0
    %840 = vadd.xlane.f32.xlu0 %v839
    %v841 = vpop.xlane.xlu0 %840
    %v842 = vsel %vm87, %v834, 0.0
    %843 = vadd.xlane.f32.xlu0 %v842
    %v844 = vpop.xlane.xlu0 %843
    %v845 = vmul.f32 %v841, %v389
    %v846 = vmul.f32 %v844, %v389
    %v847 = vmul.f32 %v829, %v829
    %v848 = vmul.f32 %v834, %v834
    %v849 = vsel %vm87, %v847, 0.0
    %850 = vadd.xlane.f32.xlu0 %v849
    %v851 = vpop.xlane.xlu0 %850
    %v852 = vsel %vm87, %v848, 0.0
    %853 = vadd.xlane.f32.xlu0 %v852
    %v854 = vpop.xlane.xlu0 %853
    %v855 = vmul.f32 %v851, %v389
    %v856 = vmul.f32 %v854, %v389
    %v857 = vmul.f32 %v845, %v845
    %v858 = vmul.f32 %v846, %v846
    %v859 = vsub.f32 %v855, %v857
    %v860 = vsub.f32 %v856, %v858
    %v861 = vsub.f32 %v829, %v845
    %v862 = vsub.f32 %v834, %v846
    %v863 = vadd.f32 %v859, 1e-05
    %v864 = vadd.f32 %v860, 1e-05
    %v865 = vrsqrt.pop %v863
    %v866 = vrsqrt.pop %v864
    %v867 = vmul.f32 %v861, %v865
    %v868 = vmul.f32 %v862, %v866
    %v869 = vlaneseq
    %v870 = vshrl.u32 %v869, 7
    %v871 = vsub.s32 0, %v870
    %v872 = vrot.slane %v837, %v871
    %v873 = vmul.f32 %v867, %v872
    %v874 = vmul.f32 %v868, %v872
    %v875 = vlaneseq
    %v876 = vshrl.u32 %v875, 7
    %v877 = vsub.s32 0, %v876
    %v878 = vrot.slane %v838, %v877
    %v879 = vadd.f32 %v873, %v878
    %v880 = vadd.f32 %v874, %v878
    %v881 = vxor.u32 %v879, 2147483648
    %v882 = vxor.u32 %v880, 2147483648
    %v883 = vmul.f32 %v881, 1.442695
    %v884 = vpow.pop %v883
    %v885 = vmul.f32 %v882, 1.442695
    %v886 = vpow.pop %v885
    %v887 = vadd.f32 %v884, 1.0
    %v888 = vadd.f32 %v886, 1.0
    %v889 = vrcp.pop %v887
    %v890 = vmul.f32 1.0, %v889
    %v891 = vrcp.pop %v888
    %v892 = vmul.f32 1.0, %v891
    %v893 = vmul.f32 %v879, %v890
    %v894 = vmul.f32 %v880, %v892
    %v895 = vadd.f32 %v893, %v745
    %v896 = vadd.f32 %v894, %v746
    %v897 = vld [vmem:[%s3] sm:$0xff]
    %v898 = vld [vmem:[%s3 + $0x8] sm:$0xff]
    %v899 = vld [vmem:[%s3 + $0x10] sm:$0xff]
    %v900 = vld [vmem:[%s3 + $0x18] sm:$0xff]
    %v901 = vld [vmem:[%s3 + $0x20] sm:$0xff]
    %v902 = vld [vmem:[%s3 + $0x28] sm:$0xff]
    %v903 = vld [vmem:[%s3 + $0x30] sm:$0xff]
    %v904 = vld [vmem:[%s3 + $0x38] sm:$0xff]
    %v905 = vld [vmem:[%s3 + $0x40] sm:$0x1]
    %v906 = vlaneseq
    %v907 = vshrl.u32 %v906, 7
    %v908 = vsub.s32 0, %v907
    %v909 = vrot.slane %v905, %v908
    %v911 = vsel %vm87, %v895, 0
    %v914 = vsel %vm87, %v896, 0
    %916 = vmatprep.subr.mxu0 0.0
    %917 = vmatpush1.msra.mxu0 %v897
    %918 = vmatprep.subr.mxu0 0.0
    %919 = vmatpush1.msra.mxu0 %v898
    %920 = vmatprep.subr.mxu0 0.0
    %921 = vmatpush1.msra.mxu0 %v899
    %922 = vmatprep.subr.mxu0 0.0
    %923 = vmatpush1.msra.mxu0 %v900
    %924 = vmatprep.subr.mxu0 0.0
    %925 = vmatpush1.msra.mxu0 %v901
    %926 = vmatprep.subr.mxu0 0.0
    %927 = vmatpush1.msra.mxu0 %v902
    %928 = vmatprep.subr.mxu0 0.0
    %929 = vmatpush1.msra.mxu0 %v903
    %930 = vmatprep.subr.mxu0 0.0
    %931 = vmatpush1.msra.mxu0 %v904
    %932 = vmatprep.subr.mxu0 0.0
    %933 = vmatpush1.msra.mxu0 0.0
    %934 = vmatprep.subr.mxu0 0.0
    %935 = vmatpush1.msra.mxu0 0.0
    %936 = vmatprep.subr.mxu0 0.0
    %937 = vmatpush1.msra.mxu0 0.0
    %938 = vmatprep.subr.mxu0 0.0
    %939 = vmatpush1.msra.mxu0 0.0
    %940 = vmatprep.subr.mxu0 0.0
    %941 = vmatpush1.msra.mxu0 0.0
    %942 = vmatprep.subr.mxu0 0.0
    %943 = vmatpush1.msra.mxu0 0.0
    %944 = vmatprep.subr.mxu0 0.0
    %945 = vmatpush1.msra.mxu0 0.0
    %946 = vmatprep.subr.mxu0 0.0
    %947 = vmatpush1.msra.mxu0 0.0
    %948 = vmatprep.subr.mxu0 0.0
    %949 = vmatpush1.msra.mxu0 0.0
    %950 = vmatprep.subr.mxu0 0.0
    %951 = vmatpush1.msra.mxu0 0.0
    %952 = vmatprep.subr.mxu0 0.0
    %953 = vmatpush1.msra.mxu0 0.0
    %954 = vmatprep.subr.mxu0 0.0
    %955 = vmatpush1.msra.mxu0 0.0
    %956 = vmatprep.subr.mxu0 0.0
    %957 = vmatpush1.msra.mxu0 0.0
    %958 = vmatprep.subr.mxu0 0.0
    %959 = vmatpush1.msra.mxu0 0.0
    %960 = vmatprep.subr.mxu0 0.0
    %961 = vmatpush1.msra.mxu0 0.0
    %962 = vmatprep.subr.mxu0 0.0
    %963 = vmatpush1.msra.mxu0 0.0
    %964 = vmatprep.subr.mxu0 0.0
    %965 = vmatpush1.msra.mxu0 0.0
    %966 = vmatprep.subr.mxu0 0.0
    %967 = vmatpush1.msra.mxu0 0.0
    %968 = vmatprep.subr.mxu0 0.0
    %969 = vmatpush1.msra.mxu0 0.0
    %970 = vmatprep.subr.mxu0 0.0
    %971 = vmatpush1.msra.mxu0 0.0
    %972 = vmatprep.subr.mxu0 0.0
    %973 = vmatpush1.msra.mxu0 0.0
    %974 = vmatprep.subr.mxu0 0.0
    %975 = vmatpush1.msra.mxu0 0.0
    %976 = vmatprep.subr.mxu0 0.0
    %977 = vmatpush1.msra.mxu0 0.0
    %978 = vmatprep.subr.mxu0 0.0
    %979 = vmatpush1.msra.mxu0 0.0
    %980 = vmatprep.mubr.f32.mxu0 0.0
    %981 = vmatmul.mubr.f32.gmra.mrb[0].mxu0 %v911
    %v982 = vpop.f32.mrb[0].mxu0
    %v983 = vadd.f32 %v909, %v982
    %v984 = vpop.f32.mrb[0].mxu0
    %985 = vmatprep.mubr.f32.mxu0 0.0
    %986 = vmatmul.mubr.f32.gmra.mrb[0].mxu0 %v914
    %v987 = vpop.f32.mrb[0].mxu0
    %v988 = vadd.f32 %v909, %v987
    %v989 = vpop.f32.mrb[0].mxu0
    %990 = vdwg.mxu0
    %v991 = vmax.f32 %v983, 0.0
    %v992 = vmax.f32 %v988, 0.0
    %v993 = vand.u32 2147483647, %v983
    %v994 = vand.u32 2147483647, %v988
    %v995 = vsub.f32 0.0, %v993
    %v996 = vsub.f32 0.0, %v994
    %v997 = vmul.f32 %v995, 1.442695
    %v998 = vpow.pop %v997
    %v999 = vmul.f32 %v996, 1.442695
    %v1000 = vpow.pop %v999
    %v1001 = vadd.f32 %v998, 1.0
    %v1002 = vlog2.pop %v1001
    %v1003 = vmul.f32 %v1002, 0.6931472
    %v1004 = vmul.f32 -0.5, %v998
    %v1005 = vadd.f32 %v1004, 1.0
    %v1006 = vmul.f32 %v1005, %v998
    %v1007 = vand.u32 2147483647, %v998
    %vm1008 = vcmp.lt.f32.partialorder %v1007, 0.0004427343
    %v1009 = vsel %vm1008, %v1006, %v1003
    %v1010 = vadd.f32 %v1000, 1.0
    %v1011 = vlog2.pop %v1010
    %v1012 = vmul.f32 %v1011, 0.6931472
    %v1013 = vmul.f32 -0.5, %v1000
    %v1014 = vadd.f32 %v1013, 1.0
    %v1015 = vmul.f32 %v1014, %v1000
    %v1016 = vand.u32 2147483647, %v1000
    %vm1017 = vcmp.lt.f32.partialorder %v1016, 0.0004427343
    %v1018 = vsel %vm1017, %v1015, %v1012
    %v1019 = vadd.f32 %v991, %v1009
    %v1020 = vadd.f32 %v992, %v1018
    %1021 = vst.msk [vmem:[%s5] sm:$0xff] %vm301, %v1019
    %1022 = vst.msk [vmem:[%s5 + $0x8] sm:$0xff] %vm301, %v1020
    // Predicated region
    $region26: #{tpu_custom_call.1} parent=1 // pred_check
      _
    $region27: #{tpu_custom_call.1} parent=1 // pred_check_branch
      %1024 = sbr.rel (0) target = $region29
    $region28: #{tpu_custom_call.1} parent=1 // pred_region
      _
    $region29: #{tpu_custom_call.1} parent=1 // pred_fallthru
      _
    // Predicated region
    $region30: #{tpu_custom_call.1} parent=1 // pred_check
      _
    $region31: #{tpu_custom_call.1} parent=1 // pred_check_branch
      %1026 = sbr.rel (0) target = $region33
    $region32: #{tpu_custom_call.1} parent=1 // pred_region
      _
    $region33: #{tpu_custom_call.1} parent=1 // pred_fallthru
      _
    %1027 = vsyncpa [#allocation3], 1

</llo_original>
